<compile_context>
chip_gen: v7x
topology: tpu7x:2x2x1
jax: 0.10.0
libtpu: 0.0.40
codegen_flags: <defaults>
</compile_context>

<pallas_src>
import functools

import numpy as np

import jax
import jax.numpy as jnp
from jax import lax
from jax.experimental import pallas as pl
from jax.experimental.pallas import tpu as pltpu

EPS = 1e-4  # LTNtorch fuzzy_ops stability epsilon


# ---------------------------------------------------------------------------
# Host-side (trace-time) guard target table f(c1, c2).
# ---------------------------------------------------------------------------
@functools.lru_cache(maxsize=None)
def _pair_table(C, task):
    c1, c2 = np.meshgrid(np.arange(C), np.arange(C), indexing="ij")
    if task == "addition":
        tgt = c1 + c2
    elif task == "product":
        tgt = c1 * c2
    elif task == "multiop":
        tgt = c1 * c1 + c2 * c2 + c1 * c2
    else:
        raise ValueError(f"unknown task {task}")
    return tgt.astype(np.int32)


# ---------------------------------------------------------------------------
# Kernel: per-block lane-folded partial sums of the Forall squared error.
# Batch lives on the 128-lane axis; classes on sublanes.
# ---------------------------------------------------------------------------
def _sat_agg_err_kernel(tgt_ref, p1_ref, p2_ref, lab_ref, out_ref, *, grade, batch):
    g = grade                                   # static python int
    C, nb = p1_ref.shape                        # (classes, block_b)
    one_m = 1.0 - EPS

    # Fold every pi0 scale into two per-block tensors so each c1 slice is one
    # multiply + one add:   a[c2,b] = p1[c1,b]*q2s[c2,b] + q2k[c2,b]
    #   = (1-e)*((1-e)*p1+e)*((1-e)*p2+e) + e   (the LTN stable AndProd + Exists pi0)
    q2 = one_m * p2_ref[...] + EPS              # (C, nb)  pi0(p2)
    q2s = (one_m * one_m) * q2                  # (1-e)^2 * pi0(p2)
    q2k = (EPS * one_m) * q2 + EPS              # e*(1-e)*pi0(p2) + e

    lab = lab_ref[...]                          # (1, nb) int32

    acc = jnp.zeros((C, nb), jnp.float32)       # sum of masked a**g   (Exists numerator)
    cnt = jnp.zeros((C, nb), jnp.float32)       # guard count          (Exists denominator)
    # Unrolled c1 loop: per-iteration live set is a handful of (C, nb) tensors, so no
    # vreg spills even at block_b=256 (the old fused (C,C,block_b) form spilled).
    for c1 in range(C):
        row = p1_ref[c1:c1 + 1, :]              # (1, nb) raw p1[:, c1]
        a = row * q2s + q2k                     # (C, nb) — 2 VALU passes
        ag = a ** g                             # integer_pow (g static)
        mask = tgt_ref[c1] == lab               # (C, 1) == (1, nb) -> (C, nb), int32 cmp
        acc = acc + jnp.where(mask, ag, 0.0)
        cnt = cnt + jnp.where(mask, 1.0, 0.0)

    num = jnp.sum(acc, axis=0, keepdims=True)   # (1, nb) single sublane reduction (XLU)
    den = jnp.sum(cnt, axis=0, keepdims=True)   # (1, nb)

    # Exact divide on the tiny reduced tensor (review: avoid approx recip on counts).
    pm = jnp.where(den > 0.0, num / jnp.maximum(den, 1.0), 1.0)
    if g == 1:
        root = pm
    elif g == 2:
        root = jnp.sqrt(pm)
    else:
        root = jnp.exp(jnp.log(pm) * (1.0 / g))
    exists = jnp.where(den > 0.0, root, 0.0)    # empty guard -> 0 (LTN NaN replacement)

    e = 1.0 - one_m * exists                    # Forall pi1 (stable), p=2
    err = e * e                                 # per-sample squared error, lane-dense

    # Mask padded batch lanes in-kernel (B is static), then fold the block's lanes into
    # a single (1, 128) partial sum: aligned 128-lane slices, plain vreg adds.
    lane = lax.broadcasted_iota(jnp.int32, (1, nb), 1) + pl.program_id(0) * nb
    err = jnp.where(lane < batch, err, 0.0)
    part = err[:, 0:128]
    for k in range(1, nb // 128):
        part = part + err[:, k * 128:(k + 1) * 128]
    out_ref[0] = part                           # out block (1, 1, 128)


# ---------------------------------------------------------------------------
# Wrapper
# ---------------------------------------------------------------------------
def _pick_block(b_pad):
    # Cap at 256 lanes (spill-free with the c1-loop form on all generations) and force
    # >= 2 grid blocks once b_pad >= 256 so the "parallel" axis uses both v7x TCs.
    max_blk = 256
    if b_pad >= 256:
        max_blk = min(max_blk, b_pad // 2)
    best, cand = 128, 128
    while cand <= max_blk:
        if b_pad % cand == 0:
            best = cand
        cand += 128
    return best


@functools.partial(jax.jit, static_argnums=(3, 4))
def _sat_agg_loss_impl(p1, p2, labels, grade, task):
    B, C = p1.shape
    g = int(grade)
    tgt_np = _pair_table(C, task)

    b_pad = pl.cdiv(B, 128) * 128
    block_b = _pick_block(b_pad)
    nblk = b_pad // block_b
    pad = b_pad - B

    # Lane-dense layouts: batch on the last / 128-lane axis.
    p1t = jnp.pad(p1.astype(jnp.float32).T, ((0, 0), (0, pad)))       # (C, b_pad)
    p2t = jnp.pad(p2.astype(jnp.float32).T, ((0, 0), (0, pad)))       # (C, b_pad)
    lab = jnp.pad(labels.astype(jnp.int32), (0, pad))[None, :]        # (1, b_pad)
    tgt = jnp.asarray(tgt_np)[:, :, None]                             # (C, C, 1) int32

    kern = functools.partial(_sat_agg_err_kernel, grade=g, batch=B)
    parts = pl.pallas_call(
        kern,
        out_shape=jax.ShapeDtypeStruct((nblk, 1, 128), jnp.float32),
        grid=(nblk,),
        in_specs=[
            pl.BlockSpec((C, C, 1), lambda i: (0, 0, 0)),             # guard target table
            pl.BlockSpec((C, block_b), lambda i: (0, i)),             # p1 (lane-dense)
            pl.BlockSpec((C, block_b), lambda i: (0, i)),             # p2 (lane-dense)
            pl.BlockSpec((1, block_b), lambda i: (0, i)),             # labels (int32)
        ],
        out_specs=pl.BlockSpec((1, 1, 128), lambda i: (i, 0, 0)),     # per-block partials
        compiler_params=pltpu.CompilerParams(
            dimension_semantics=("parallel",)),                       # megacore / v7x 2 TC
    )(tgt, p1t, p2t, lab)

    # Tiny XLA epilogue: Forall mean over the real batch (padding already zeroed).
    return jnp.sqrt(jnp.sum(parts) / B)


# custom_vjp: pallas_call has no autodiff rule; backward uses the pure-JAX reference.
@functools.partial(jax.custom_vjp, nondiff_argnums=(3, 4))
def _sat_agg_loss_vjp(p1, p2, labels, grade, task):
    return _sat_agg_loss_impl(p1, p2, labels, grade, task)


def _sat_agg_fwd(p1, p2, labels, grade, task):
    return _sat_agg_loss_impl(p1, p2, labels, grade, task), (p1, p2, labels)


def _sat_agg_bwd(grade, task, res, ct):
    p1, p2, labels = res
    _, vjp = jax.vjp(lambda a, b: sat_agg_loss_ref(a, b, labels, grade, task), p1, p2)
    dp1, dp2 = vjp(ct)
    return dp1, dp2, np.zeros(labels.shape, dtype=jax.dtypes.float0)


_sat_agg_loss_vjp.defvjp(_sat_agg_fwd, _sat_agg_bwd)


def sat_agg_loss_pallas(p1, p2, labels, grade, task="addition"):
    """1 - SatAgg for the LTN addition/product/multiop loss (Pallas TPU)."""
    return _sat_agg_loss_vjp(p1, p2, labels, int(grade), task)


# ---------------------------------------------------------------------------
# Pure-JAX reference (validation + backward pass)
# ---------------------------------------------------------------------------
def sat_agg_loss_ref(p1, p2, labels, grade, task="addition"):
    B, C = p1.shape
    g = int(grade)
    q1 = (1.0 - EPS) * p1.astype(jnp.float32) + EPS
    q2 = (1.0 - EPS) * p2.astype(jnp.float32) + EPS
    a = (1.0 - EPS) * (q1[:, :, None] * q2[:, None, :]) + EPS
    c1 = jnp.arange(C)[:, None]
    c2 = jnp.arange(C)[None, :]
    if task == "addition":
        t = c1 + c2
    elif task == "product":
        t = c1 * c2
    else:
        t = c1 * c1 + c2 * c2 + c1 * c2
    m = (t[None, :, :] == labels[:, None, None]).astype(jnp.float32)
    num = jnp.sum(m * a ** g, axis=(1, 2))
    den = jnp.sum(m, axis=(1, 2))
    pm = jnp.where(den > 0, num / jnp.maximum(den, 1.0), 1.0)   # safe-where (grad-safe)
    ex = jnp.where(den > 0, pm ** (1.0 / g), 0.0)
    err = (1.0 - (1.0 - EPS) * ex) ** 2
    return jnp.sqrt(jnp.mean(err))


# ---------------------------------------------------------------------------
# Module port
# ---------------------------------------------------------------------------
class ADDMNIST_SAT_AGG:
    """JAX port of XOR_MNIST/utils/ltn_loss.py::ADDMNIST_SAT_AGG."""

    def __init__(self, loss, task="addition", nr_classes=19, pcbm=False):
        self.base_loss = loss
        self.task = task
        self.pcbm = pcbm
        self.beta = 0.001
        if task == "addition":
            self.nr_classes = 19
        elif task == "product":
            self.nr_classes = 81
        elif task == "multiop":
            self.nr_classes = 15
        self.grade = 2

    def update_grade(self, epoch):
        if epoch in range(0, 4):
            self.grade = 2
        if epoch in range(4, 8):
            self.grade = 3
        if epoch in range(8, 12):
            self.grade = 6
        if epoch in range(12, 20):
            self.grade = 9
        if epoch in range(20, 100):
            self.grade = 10

    def forward(self, out_dict, args):
        loss, losses = self.base_loss(out_dict, args)
        Ys = out_dict["LABELS"]
        pCs = out_dict["pCS"]
        prob_digit1, prob_digit2 = pCs[:, 0, :], pCs[:, 1, :]
        sat_loss = sat_agg_loss_pallas(prob_digit1, prob_digit2, Ys,
                                       self.grade, self.task)
        losses = dict(losses)
        # Perf: return the device scalar (original code's .item() forces a per-step
        # host sync that dwarfs the kernel; callers can log asynchronously).
        losses.update({"sat-loss": sat_loss})
        # TODO(synk): pcbm KL branch depends on external kl_divergence(); upstream also
        # references kl_div unconditionally (NameError when pcbm=False) — we use 0.
        kl_div = jnp.float32(0.0)
        return loss + sat_loss + self.beta * kl_div, losses


if __name__ == "__main__":
    key = jax.random.PRNGKey(0)
    k1, k2, k3, k4 = jax.random.split(key, 4)

    # Small demo consistent with the module: batch=8, 2 digits, 10 concept classes.
    B, C = 8, 10
    logits = jax.random.normal(k1, (B, 2, C), jnp.float32)
    pCs = jax.nn.softmax(logits, axis=-1)                     # (B, 2, C)
    labels = jax.random.randint(k2, (B,), 0, 19, jnp.int32)   # sums in [0, 18]

    out_dict = {"LABELS": labels, "pCS": pCs}
    # TODO(synk): base_loss is an injected dependency of the module; zero placeholder.
    base_loss = lambda od, args: (jnp.float32(0.0), {})

    mod = ADDMNIST_SAT_AGG(base_loss, task="addition")
    total, losses = mod.forward(out_dict, args=None)
    total = jax.block_until_ready(total)

    ref = sat_agg_loss_ref(pCs[:, 0, :], pCs[:, 1, :], labels, mod.grade, "addition")
    got = float(jax.device_get(losses["sat-loss"]))
    assert abs(got - float(ref)) < 1e-3, (got, float(ref))

    # Multi-block check: exercises padding, grid > 1 ("parallel"), and the general root.
    B2 = 260
    logits2 = jax.random.normal(k3, (B2, 2, C), jnp.float32)
    pCs2 = jax.nn.softmax(logits2, axis=-1)
    labels2 = jax.random.randint(k4, (B2,), 0, 19, jnp.int32)
    out2 = jax.block_until_ready(
        sat_agg_loss_pallas(pCs2[:, 0, :], pCs2[:, 1, :], labels2, 3, "addition"))
    ref2 = sat_agg_loss_ref(pCs2[:, 0, :], pCs2[:, 1, :], labels2, 3, "addition")
    assert abs(float(out2) - float(ref2)) < 1e-3, (float(out2), float(ref2))

    # Training-path sanity: custom_vjp backward (pure-JAX reference) works and is finite.
    gfn = jax.grad(lambda a, b: sat_agg_loss_pallas(a, b, labels, 2, "addition"),
                   argnums=(0, 1))
    g1, g2 = jax.block_until_ready(gfn(pCs[:, 0, :], pCs[:, 1, :]))
    assert g1.shape == (B, C) and g2.shape == (B, C)
    assert bool(jnp.isfinite(g1).all()) and bool(jnp.isfinite(g2).all())

    print("KERNEL_OK")
</pallas_src>

<mosaic_0001>
module attributes {stable_mosaic.version = 11 : i64} {
  func.func @_sat_agg_err_kernel(%arg0: i32, %arg1: memref<10x10x1xi32, #tpu.memory_space<vmem>>, %arg2: memref<10x128xf32, #tpu.memory_space<vmem>>, %arg3: memref<10x128xf32, #tpu.memory_space<vmem>>, %arg4: memref<1x128xi32, #tpu.memory_space<vmem>>, %arg5: memref<1x1x128xf32, #tpu.memory_space<vmem>>) attributes {dimension_semantics = [#tpu.dimension_semantics<parallel>], iteration_bounds = array<i64: 1>, scalar_prefetch = 0 : i64, scratch_operands = 0 : i64, tpu.core_type = #tpu.core_type<tc>, window_params = [{pipeline_mode = #tpu.pipeline_mode<synchronous>, transform_indices = @transform_0, window_bounds = array<i64: 10, 10, 1>}, {transform_indices = @transform_1, window_bounds = array<i64: 10, 128>}, {transform_indices = @transform_2, window_bounds = array<i64: 10, 128>}, {transform_indices = @transform_3, window_bounds = array<i64: 1, 128>}, {transform_indices = @transform_4, window_bounds = array<i64: 1, 1, 128>}]} {
    %c0 = arith.constant 0 : index
    %c0_0 = arith.constant 0 : index
    %0 = vector.load %arg3[%c0, %c0_0] : memref<10x128xf32, #tpu.memory_space<vmem>>, vector<10x128xf32>
    %cst = arith.constant 0.999899983 : f32
    %1 = vector.broadcast %cst : f32 to vector<10x128xf32>
    %2 = arith.mulf %1, %0 : vector<10x128xf32>
    %cst_1 = arith.constant 9.99999974E-5 : f32
    %3 = vector.broadcast %cst_1 : f32 to vector<10x128xf32>
    %4 = arith.addf %2, %3 : vector<10x128xf32>
    %cst_2 = arith.constant 9.998000e-01 : f32
    %5 = vector.broadcast %cst_2 : f32 to vector<10x128xf32>
    %6 = arith.mulf %5, %4 : vector<10x128xf32>
    %cst_3 = arith.constant 9.999000e-05 : f32
    %7 = vector.broadcast %cst_3 : f32 to vector<10x128xf32>
    %8 = arith.mulf %7, %4 : vector<10x128xf32>
    %cst_4 = arith.constant 9.99999974E-5 : f32
    %9 = vector.broadcast %cst_4 : f32 to vector<10x128xf32>
    %10 = arith.addf %8, %9 : vector<10x128xf32>
    %c0_5 = arith.constant 0 : index
    %c0_6 = arith.constant 0 : index
    %11 = vector.load %arg4[%c0_5, %c0_6] : memref<1x128xi32, #tpu.memory_space<vmem>>, vector<1x128xi32>
    %cst_7 = arith.constant 0.000000e+00 : f32
    %12 = vector.broadcast %cst_7 : f32 to vector<10x128xf32>
    %cst_8 = arith.constant 0.000000e+00 : f32
    %13 = vector.broadcast %cst_8 : f32 to vector<10x128xf32>
    %c0_9 = arith.constant 0 : index
    %c0_10 = arith.constant 0 : index
    %14 = vector.load %arg2[%c0_9, %c0_10] : memref<10x128xf32, #tpu.memory_space<vmem>>, vector<1x128xf32>
    %15 = vector.broadcast %14 : vector<1x128xf32> to vector<10x128xf32>
    %16 = arith.mulf %15, %6 : vector<10x128xf32>
    %17 = arith.addf %16, %10 : vector<10x128xf32>
    %18 = arith.mulf %17, %17 : vector<10x128xf32>
    %c0_11 = arith.constant 0 : index
    %c0_12 = arith.constant 0 : index
    %c0_13 = arith.constant 0 : index
    %19 = vector.load %arg1[%c0_11, %c0_12, %c0_13] : memref<10x10x1xi32, #tpu.memory_space<vmem>>, vector<1x10x1xi32>
    %20 = vector.shape_cast %19 : vector<1x10x1xi32> to vector<10x1xi32>
    %21 = vector.broadcast %20 : vector<10x1xi32> to vector<10x128xi32>
    %22 = vector.broadcast %11 : vector<1x128xi32> to vector<10x128xi32>
    %23 = arith.cmpi eq, %21, %22 : vector<10x128xi32>
    %cst_14 = arith.constant 0.000000e+00 : f32
    %24 = vector.broadcast %cst_14 : f32 to vector<10x128xf32>
    %25 = arith.select %23, %18, %24 : vector<10x128xi1>, vector<10x128xf32>
    %26 = arith.addf %12, %25 : vector<10x128xf32>
    %cst_15 = arith.constant 1.000000e+00 : f32
    %cst_16 = arith.constant 0.000000e+00 : f32
    %27 = vector.broadcast %cst_15 : f32 to vector<10x128xf32>
    %28 = vector.broadcast %cst_16 : f32 to vector<10x128xf32>
    %29 = arith.select %23, %27, %28 : vector<10x128xi1>, vector<10x128xf32>
    %30 = arith.addf %13, %29 : vector<10x128xf32>
    %c1 = arith.constant 1 : index
    %c0_17 = arith.constant 0 : index
    %31 = vector.load %arg2[%c1, %c0_17] : memref<10x128xf32, #tpu.memory_space<vmem>>, vector<1x128xf32>
    %32 = vector.broadcast %31 : vector<1x128xf32> to vector<10x128xf32>
    %33 = arith.mulf %32, %6 : vector<10x128xf32>
    %34 = arith.addf %33, %10 : vector<10x128xf32>
    %35 = arith.mulf %34, %34 : vector<10x128xf32>
    %c1_18 = arith.constant 1 : index
    %c0_19 = arith.constant 0 : index
    %c0_20 = arith.constant 0 : index
    %36 = vector.load %arg1[%c1_18, %c0_19, %c0_20] : memref<10x10x1xi32, #tpu.memory_space<vmem>>, vector<1x10x1xi32>
    %37 = vector.shape_cast %36 : vector<1x10x1xi32> to vector<10x1xi32>
    %38 = vector.broadcast %37 : vector<10x1xi32> to vector<10x128xi32>
    %39 = vector.broadcast %11 : vector<1x128xi32> to vector<10x128xi32>
    %40 = arith.cmpi eq, %38, %39 : vector<10x128xi32>
    %cst_21 = arith.constant 0.000000e+00 : f32
    %41 = vector.broadcast %cst_21 : f32 to vector<10x128xf32>
    %42 = arith.select %40, %35, %41 : vector<10x128xi1>, vector<10x128xf32>
    %43 = arith.addf %26, %42 : vector<10x128xf32>
    %cst_22 = arith.constant 1.000000e+00 : f32
    %cst_23 = arith.constant 0.000000e+00 : f32
    %44 = vector.broadcast %cst_22 : f32 to vector<10x128xf32>
    %45 = vector.broadcast %cst_23 : f32 to vector<10x128xf32>
    %46 = arith.select %40, %44, %45 : vector<10x128xi1>, vector<10x128xf32>
    %47 = arith.addf %30, %46 : vector<10x128xf32>
    %c2 = arith.constant 2 : index
    %c0_24 = arith.constant 0 : index
    %48 = vector.load %arg2[%c2, %c0_24] : memref<10x128xf32, #tpu.memory_space<vmem>>, vector<1x128xf32>
    %49 = vector.broadcast %48 : vector<1x128xf32> to vector<10x128xf32>
    %50 = arith.mulf %49, %6 : vector<10x128xf32>
    %51 = arith.addf %50, %10 : vector<10x128xf32>
    %52 = arith.mulf %51, %51 : vector<10x128xf32>
    %c2_25 = arith.constant 2 : index
    %c0_26 = arith.constant 0 : index
    %c0_27 = arith.constant 0 : index
    %53 = vector.load %arg1[%c2_25, %c0_26, %c0_27] : memref<10x10x1xi32, #tpu.memory_space<vmem>>, vector<1x10x1xi32>
    %54 = vector.shape_cast %53 : vector<1x10x1xi32> to vector<10x1xi32>
    %55 = vector.broadcast %54 : vector<10x1xi32> to vector<10x128xi32>
    %56 = vector.broadcast %11 : vector<1x128xi32> to vector<10x128xi32>
    %57 = arith.cmpi eq, %55, %56 : vector<10x128xi32>
    %cst_28 = arith.constant 0.000000e+00 : f32
    %58 = vector.broadcast %cst_28 : f32 to vector<10x128xf32>
    %59 = arith.select %57, %52, %58 : vector<10x128xi1>, vector<10x128xf32>
    %60 = arith.addf %43, %59 : vector<10x128xf32>
    %cst_29 = arith.constant 1.000000e+00 : f32
    %cst_30 = arith.constant 0.000000e+00 : f32
    %61 = vector.broadcast %cst_29 : f32 to vector<10x128xf32>
    %62 = vector.broadcast %cst_30 : f32 to vector<10x128xf32>
    %63 = arith.select %57, %61, %62 : vector<10x128xi1>, vector<10x128xf32>
    %64 = arith.addf %47, %63 : vector<10x128xf32>
    %c3 = arith.constant 3 : index
    %c0_31 = arith.constant 0 : index
    %65 = vector.load %arg2[%c3, %c0_31] : memref<10x128xf32, #tpu.memory_space<vmem>>, vector<1x128xf32>
    %66 = vector.broadcast %65 : vector<1x128xf32> to vector<10x128xf32>
    %67 = arith.mulf %66, %6 : vector<10x128xf32>
    %68 = arith.addf %67, %10 : vector<10x128xf32>
    %69 = arith.mulf %68, %68 : vector<10x128xf32>
    %c3_32 = arith.constant 3 : index
    %c0_33 = arith.constant 0 : index
    %c0_34 = arith.constant 0 : index
    %70 = vector.load %arg1[%c3_32, %c0_33, %c0_34] : memref<10x10x1xi32, #tpu.memory_space<vmem>>, vector<1x10x1xi32>
    %71 = vector.shape_cast %70 : vector<1x10x1xi32> to vector<10x1xi32>
    %72 = vector.broadcast %71 : vector<10x1xi32> to vector<10x128xi32>
    %73 = vector.broadcast %11 : vector<1x128xi32> to vector<10x128xi32>
    %74 = arith.cmpi eq, %72, %73 : vector<10x128xi32>
    %cst_35 = arith.constant 0.000000e+00 : f32
    %75 = vector.broadcast %cst_35 : f32 to vector<10x128xf32>
    %76 = arith.select %74, %69, %75 : vector<10x128xi1>, vector<10x128xf32>
    %77 = arith.addf %60, %76 : vector<10x128xf32>
    %cst_36 = arith.constant 1.000000e+00 : f32
    %cst_37 = arith.constant 0.000000e+00 : f32
    %78 = vector.broadcast %cst_36 : f32 to vector<10x128xf32>
    %79 = vector.broadcast %cst_37 : f32 to vector<10x128xf32>
    %80 = arith.select %74, %78, %79 : vector<10x128xi1>, vector<10x128xf32>
    %81 = arith.addf %64, %80 : vector<10x128xf32>
    %c4 = arith.constant 4 : index
    %c0_38 = arith.constant 0 : index
    %82 = vector.load %arg2[%c4, %c0_38] : memref<10x128xf32, #tpu.memory_space<vmem>>, vector<1x128xf32>
    %83 = vector.broadcast %82 : vector<1x128xf32> to vector<10x128xf32>
    %84 = arith.mulf %83, %6 : vector<10x128xf32>
    %85 = arith.addf %84, %10 : vector<10x128xf32>
    %86 = arith.mulf %85, %85 : vector<10x128xf32>
    %c4_39 = arith.constant 4 : index
    %c0_40 = arith.constant 0 : index
    %c0_41 = arith.constant 0 : index
    %87 = vector.load %arg1[%c4_39, %c0_40, %c0_41] : memref<10x10x1xi32, #tpu.memory_space<vmem>>, vector<1x10x1xi32>
    %88 = vector.shape_cast %87 : vector<1x10x1xi32> to vector<10x1xi32>
    %89 = vector.broadcast %88 : vector<10x1xi32> to vector<10x128xi32>
    %90 = vector.broadcast %11 : vector<1x128xi32> to vector<10x128xi32>
    %91 = arith.cmpi eq, %89, %90 : vector<10x128xi32>
    %cst_42 = arith.constant 0.000000e+00 : f32
    %92 = vector.broadcast %cst_42 : f32 to vector<10x128xf32>
    %93 = arith.select %91, %86, %92 : vector<10x128xi1>, vector<10x128xf32>
    %94 = arith.addf %77, %93 : vector<10x128xf32>
    %cst_43 = arith.constant 1.000000e+00 : f32
    %cst_44 = arith.constant 0.000000e+00 : f32
    %95 = vector.broadcast %cst_43 : f32 to vector<10x128xf32>
    %96 = vector.broadcast %cst_44 : f32 to vector<10x128xf32>
    %97 = arith.select %91, %95, %96 : vector<10x128xi1>, vector<10x128xf32>
    %98 = arith.addf %81, %97 : vector<10x128xf32>
    %c5 = arith.constant 5 : index
    %c0_45 = arith.constant 0 : index
    %99 = vector.load %arg2[%c5, %c0_45] : memref<10x128xf32, #tpu.memory_space<vmem>>, vector<1x128xf32>
    %100 = vector.broadcast %99 : vector<1x128xf32> to vector<10x128xf32>
    %101 = arith.mulf %100, %6 : vector<10x128xf32>
    %102 = arith.addf %101, %10 : vector<10x128xf32>
    %103 = arith.mulf %102, %102 : vector<10x128xf32>
    %c5_46 = arith.constant 5 : index
    %c0_47 = arith.constant 0 : index
    %c0_48 = arith.constant 0 : index
    %104 = vector.load %arg1[%c5_46, %c0_47, %c0_48] : memref<10x10x1xi32, #tpu.memory_space<vmem>>, vector<1x10x1xi32>
    %105 = vector.shape_cast %104 : vector<1x10x1xi32> to vector<10x1xi32>
    %106 = vector.broadcast %105 : vector<10x1xi32> to vector<10x128xi32>
    %107 = vector.broadcast %11 : vector<1x128xi32> to vector<10x128xi32>
    %108 = arith.cmpi eq, %106, %107 : vector<10x128xi32>
    %cst_49 = arith.constant 0.000000e+00 : f32
    %109 = vector.broadcast %cst_49 : f32 to vector<10x128xf32>
    %110 = arith.select %108, %103, %109 : vector<10x128xi1>, vector<10x128xf32>
    %111 = arith.addf %94, %110 : vector<10x128xf32>
    %cst_50 = arith.constant 1.000000e+00 : f32
    %cst_51 = arith.constant 0.000000e+00 : f32
    %112 = vector.broadcast %cst_50 : f32 to vector<10x128xf32>
    %113 = vector.broadcast %cst_51 : f32 to vector<10x128xf32>
    %114 = arith.select %108, %112, %113 : vector<10x128xi1>, vector<10x128xf32>
    %115 = arith.addf %98, %114 : vector<10x128xf32>
    %c6 = arith.constant 6 : index
    %c0_52 = arith.constant 0 : index
    %116 = vector.load %arg2[%c6, %c0_52] : memref<10x128xf32, #tpu.memory_space<vmem>>, vector<1x128xf32>
    %117 = vector.broadcast %116 : vector<1x128xf32> to vector<10x128xf32>
    %118 = arith.mulf %117, %6 : vector<10x128xf32>
    %119 = arith.addf %118, %10 : vector<10x128xf32>
    %120 = arith.mulf %119, %119 : vector<10x128xf32>
    %c6_53 = arith.constant 6 : index
    %c0_54 = arith.constant 0 : index
    %c0_55 = arith.constant 0 : index
    %121 = vector.load %arg1[%c6_53, %c0_54, %c0_55] : memref<10x10x1xi32, #tpu.memory_space<vmem>>, vector<1x10x1xi32>
    %122 = vector.shape_cast %121 : vector<1x10x1xi32> to vector<10x1xi32>
    %123 = vector.broadcast %122 : vector<10x1xi32> to vector<10x128xi32>
    %124 = vector.broadcast %11 : vector<1x128xi32> to vector<10x128xi32>
    %125 = arith.cmpi eq, %123, %124 : vector<10x128xi32>
    %cst_56 = arith.constant 0.000000e+00 : f32
    %126 = vector.broadcast %cst_56 : f32 to vector<10x128xf32>
    %127 = arith.select %125, %120, %126 : vector<10x128xi1>, vector<10x128xf32>
    %128 = arith.addf %111, %127 : vector<10x128xf32>
    %cst_57 = arith.constant 1.000000e+00 : f32
    %cst_58 = arith.constant 0.000000e+00 : f32
    %129 = vector.broadcast %cst_57 : f32 to vector<10x128xf32>
    %130 = vector.broadcast %cst_58 : f32 to vector<10x128xf32>
    %131 = arith.select %125, %129, %130 : vector<10x128xi1>, vector<10x128xf32>
    %132 = arith.addf %115, %131 : vector<10x128xf32>
    %c7 = arith.constant 7 : index
    %c0_59 = arith.constant 0 : index
    %133 = vector.load %arg2[%c7, %c0_59] : memref<10x128xf32, #tpu.memory_space<vmem>>, vector<1x128xf32>
    %134 = vector.broadcast %133 : vector<1x128xf32> to vector<10x128xf32>
    %135 = arith.mulf %134, %6 : vector<10x128xf32>
    %136 = arith.addf %135, %10 : vector<10x128xf32>
    %137 = arith.mulf %136, %136 : vector<10x128xf32>
    %c7_60 = arith.constant 7 : index
    %c0_61 = arith.constant 0 : index
    %c0_62 = arith.constant 0 : index
    %138 = vector.load %arg1[%c7_60, %c0_61, %c0_62] : memref<10x10x1xi32, #tpu.memory_space<vmem>>, vector<1x10x1xi32>
    %139 = vector.shape_cast %138 : vector<1x10x1xi32> to vector<10x1xi32>
    %140 = vector.broadcast %139 : vector<10x1xi32> to vector<10x128xi32>
    %141 = vector.broadcast %11 : vector<1x128xi32> to vector<10x128xi32>
    %142 = arith.cmpi eq, %140, %141 : vector<10x128xi32>
    %cst_63 = arith.constant 0.000000e+00 : f32
    %143 = vector.broadcast %cst_63 : f32 to vector<10x128xf32>
    %144 = arith.select %142, %137, %143 : vector<10x128xi1>, vector<10x128xf32>
    %145 = arith.addf %128, %144 : vector<10x128xf32>
    %cst_64 = arith.constant 1.000000e+00 : f32
    %cst_65 = arith.constant 0.000000e+00 : f32
    %146 = vector.broadcast %cst_64 : f32 to vector<10x128xf32>
    %147 = vector.broadcast %cst_65 : f32 to vector<10x128xf32>
    %148 = arith.select %142, %146, %147 : vector<10x128xi1>, vector<10x128xf32>
    %149 = arith.addf %132, %148 : vector<10x128xf32>
    %c8 = arith.constant 8 : index
    %c0_66 = arith.constant 0 : index
    %150 = vector.load %arg2[%c8, %c0_66] : memref<10x128xf32, #tpu.memory_space<vmem>>, vector<1x128xf32>
    %151 = vector.broadcast %150 : vector<1x128xf32> to vector<10x128xf32>
    %152 = arith.mulf %151, %6 : vector<10x128xf32>
    %153 = arith.addf %152, %10 : vector<10x128xf32>
    %154 = arith.mulf %153, %153 : vector<10x128xf32>
    %c8_67 = arith.constant 8 : index
    %c0_68 = arith.constant 0 : index
    %c0_69 = arith.constant 0 : index
    %155 = vector.load %arg1[%c8_67, %c0_68, %c0_69] : memref<10x10x1xi32, #tpu.memory_space<vmem>>, vector<1x10x1xi32>
    %156 = vector.shape_cast %155 : vector<1x10x1xi32> to vector<10x1xi32>
    %157 = vector.broadcast %156 : vector<10x1xi32> to vector<10x128xi32>
    %158 = vector.broadcast %11 : vector<1x128xi32> to vector<10x128xi32>
    %159 = arith.cmpi eq, %157, %158 : vector<10x128xi32>
    %cst_70 = arith.constant 0.000000e+00 : f32
    %160 = vector.broadcast %cst_70 : f32 to vector<10x128xf32>
    %161 = arith.select %159, %154, %160 : vector<10x128xi1>, vector<10x128xf32>
    %162 = arith.addf %145, %161 : vector<10x128xf32>
    %cst_71 = arith.constant 1.000000e+00 : f32
    %cst_72 = arith.constant 0.000000e+00 : f32
    %163 = vector.broadcast %cst_71 : f32 to vector<10x128xf32>
    %164 = vector.broadcast %cst_72 : f32 to vector<10x128xf32>
    %165 = arith.select %159, %163, %164 : vector<10x128xi1>, vector<10x128xf32>
    %166 = arith.addf %149, %165 : vector<10x128xf32>
    %c9 = arith.constant 9 : index
    %c0_73 = arith.constant 0 : index
    %167 = vector.load %arg2[%c9, %c0_73] : memref<10x128xf32, #tpu.memory_space<vmem>>, vector<1x128xf32>
    %168 = vector.broadcast %167 : vector<1x128xf32> to vector<10x128xf32>
    %169 = arith.mulf %168, %6 : vector<10x128xf32>
    %170 = arith.addf %169, %10 : vector<10x128xf32>
    %171 = arith.mulf %170, %170 : vector<10x128xf32>
    %c9_74 = arith.constant 9 : index
    %c0_75 = arith.constant 0 : index
    %c0_76 = arith.constant 0 : index
    %172 = vector.load %arg1[%c9_74, %c0_75, %c0_76] : memref<10x10x1xi32, #tpu.memory_space<vmem>>, vector<1x10x1xi32>
    %173 = vector.shape_cast %172 : vector<1x10x1xi32> to vector<10x1xi32>
    %174 = vector.broadcast %173 : vector<10x1xi32> to vector<10x128xi32>
    %175 = vector.broadcast %11 : vector<1x128xi32> to vector<10x128xi32>
    %176 = arith.cmpi eq, %174, %175 : vector<10x128xi32>
    %cst_77 = arith.constant 0.000000e+00 : f32
    %177 = vector.broadcast %cst_77 : f32 to vector<10x128xf32>
    %178 = arith.select %176, %171, %177 : vector<10x128xi1>, vector<10x128xf32>
    %179 = arith.addf %162, %178 : vector<10x128xf32>
    %cst_78 = arith.constant 1.000000e+00 : f32
    %cst_79 = arith.constant 0.000000e+00 : f32
    %180 = vector.broadcast %cst_78 : f32 to vector<10x128xf32>
    %181 = vector.broadcast %cst_79 : f32 to vector<10x128xf32>
    %182 = arith.select %176, %180, %181 : vector<10x128xi1>, vector<10x128xf32>
    %183 = arith.addf %166, %182 : vector<10x128xf32>
    %cst_80 = arith.constant dense<0.000000e+00> : vector<128xf32>
    %184 = vector.multi_reduction <add>, %179, %cst_80 [0] : vector<10x128xf32> to vector<128xf32>
    %185 = vector.shape_cast %184 : vector<128xf32> to vector<1x128xf32>
    %cst_81 = arith.constant dense<0.000000e+00> : vector<128xf32>
    %186 = vector.multi_reduction <add>, %183, %cst_81 [0] : vector<10x128xf32> to vector<128xf32>
    %187 = vector.shape_cast %186 : vector<128xf32> to vector<1x128xf32>
    %cst_82 = arith.constant 0.000000e+00 : f32
    %188 = vector.broadcast %cst_82 : f32 to vector<1x128xf32>
    %189 = arith.cmpf ogt, %187, %188 : vector<1x128xf32>
    %cst_83 = arith.constant 1.000000e+00 : f32
    %190 = vector.broadcast %cst_83 : f32 to vector<1x128xf32>
    %191 = arith.maximumf %187, %190 : vector<1x128xf32>
    %192 = arith.divf %185, %191 : vector<1x128xf32>
    %cst_84 = arith.constant 1.000000e+00 : f32
    %193 = vector.broadcast %cst_84 : f32 to vector<1x128xf32>
    %194 = arith.select %189, %192, %193 : vector<1x128xi1>, vector<1x128xf32>
    %195 = math.sqrt %194 : vector<1x128xf32>
    %cst_85 = arith.constant 0.000000e+00 : f32
    %196 = vector.broadcast %cst_85 : f32 to vector<1x128xf32>
    %197 = arith.cmpf ogt, %187, %196 : vector<1x128xf32>
    %cst_86 = arith.constant 0.000000e+00 : f32
    %198 = vector.broadcast %cst_86 : f32 to vector<1x128xf32>
    %199 = arith.select %197, %195, %198 : vector<1x128xi1>, vector<1x128xf32>
    %cst_87 = arith.constant 0.999899983 : f32
    %200 = vector.broadcast %cst_87 : f32 to vector<1x128xf32>
    %201 = arith.mulf %200, %199 : vector<1x128xf32>
    %cst_88 = arith.constant 1.000000e+00 : f32
    %202 = vector.broadcast %cst_88 : f32 to vector<1x128xf32>
    %203 = arith.subf %202, %201 : vector<1x128xf32>
    %204 = arith.mulf %203, %203 : vector<1x128xf32>
    %205 = tpu.iota {dimensions = array<i32: 1>} : vector<1x128xi32>
    %c128_i32 = arith.constant 128 : i32
    %206 = arith.muli %arg0, %c128_i32 : i32
    %207 = vector.broadcast %206 : i32 to vector<1x128xi32>
    %208 = arith.addi %205, %207 : vector<1x128xi32>
    %c8_i32 = arith.constant 8 : i32
    %209 = vector.broadcast %c8_i32 : i32 to vector<1x128xi32>
    %210 = arith.cmpi slt, %208, %209 : vector<1x128xi32>
    %cst_89 = arith.constant 0.000000e+00 : f32
    %211 = vector.broadcast %cst_89 : f32 to vector<1x128xf32>
    %212 = arith.select %210, %204, %211 : vector<1x128xi1>, vector<1x128xf32>
    %c0_90 = arith.constant 0 : index
    %c0_91 = arith.constant 0 : index
    %c0_92 = arith.constant 0 : index
    %213 = vector.load %arg5[%c0_90, %c0_91, %c0_92] : memref<1x1x128xf32, #tpu.memory_space<vmem>>, vector<1x1x128xf32>
    %214 = vector.shape_cast %213 : vector<1x1x128xf32> to vector<1x128xf32>
    %215 = vector.shape_cast %212 : vector<1x128xf32> to vector<1x1x128xf32>
    tpu.vector_store %arg5[%c0_90, %c0_91, %c0_92], %215 {strides = array<i32>} : memref<1x1x128xf32, #tpu.memory_space<vmem>>, vector<1x1x128xf32>,
    return
  }
  func.func @transform_0(%arg0: i32) -> (i32, i32, i32) {
    %c0_i32 = arith.constant 0 : i32
    %c0_i32_0 = arith.constant 0 : i32
    %c0_i32_1 = arith.constant 0 : i32
    %c0_i32_2 = arith.constant 0 : i32
    return %c0_i32, %c0_i32_0, %c0_i32_1 : i32, i32, i32
  }
  func.func @transform_1(%arg0: i32) -> (i32, i32) {
    %c0_i32 = arith.constant 0 : i32
    %c0_i32_0 = arith.constant 0 : i32
    return %c0_i32, %arg0 : i32, i32
  }
  func.func @transform_2(%arg0: i32) -> (i32, i32) {
    %c0_i32 = arith.constant 0 : i32
    %c0_i32_0 = arith.constant 0 : i32
    return %c0_i32, %arg0 : i32, i32
  }
  func.func @transform_3(%arg0: i32) -> (i32, i32) {
    %c0_i32 = arith.constant 0 : i32
    %c0_i32_0 = arith.constant 0 : i32
    return %c0_i32, %arg0 : i32, i32
  }
  func.func @transform_4(%arg0: i32) -> (i32, i32, i32) {
    %c0_i32 = arith.constant 0 : i32
    %c0_i32_0 = arith.constant 0 : i32
    %c0_i32_1 = arith.constant 0 : i32
    return %arg0, %c0_i32, %c0_i32_0 : i32, i32, i32
  }
}

</mosaic_0001>

<llo_original>
// kernel: _sat_agg_loss_impl.1
$region0: #{_sat_agg_loss_impl.1}
  #allocation0 [shape = 'u32[]', space=smem, size = 0x4, offset = 0x4, fixed_abs, tag = 'smem constant byte address 0x4 - core index']
  #allocation1 [shape = 'u32[144,128]{1,0:T(1,128)}', space=vmem, size = 0x12000, scoped, tag = 'internal scratch']
  %s0 = inlined_call_operand.hbm [shape: s32[10,10,1], index: 0, kind: input, shape index: {}]
  %s1 = inlined_call_operand.vmem [shape: f32[10,128], index: 1, kind: input, shape index: {}]
  %s2 = inlined_call_operand.vmem [shape: f32[10,128], index: 2, kind: input, shape index: {}]
  %s3 = inlined_call_operand.vmem [shape: s32[1,128], index: 3, kind: input, shape index: {}]
  %s4 = inlined_call_operand.vmem [shape: f32[1,1,128], index: 4, kind: output, shape index: {}]
  %s5 = sld [smem:[#allocation0]]
  $region30: #{_sat_agg_loss_impl.1} parent=0
    _
  %s7 = ssub.s32 1, %s5
  %s8 = scalar_select 0, %s7, %s5
  $region1: #{_sat_agg_loss_impl.1} parent=0
    #allocation2 [shape = 'u8[81920]{0}', space=vmem, size = 0x14000, scoped, tag = 'input window, operand 0, single buffered']
    #allocation3 [shape = 's32[1]{0}', space=sflag, size = 0x4, scoped, tag = 'scoped memory for _sat_agg_loss_impl.1']
    %9 = vsyncpa [#allocation3], 0
    // Predicated region
    $region2: #{_sat_agg_loss_impl.1} parent=1 // pred_check
      _
    $region3: #{_sat_agg_loss_impl.1} parent=1 // pred_check_branch
      %11 = sbr.rel (0) target = $region5
    $region4: #{_sat_agg_loss_impl.1} parent=1 // pred_region
      %s13 = ssub.s32 2560, 2560
      %14 = vsyncadd [#allocation3], %s13
      %s15 = sshll.u32 [#allocation2], 4
      %s16 = int_to_ptr.vmem [resolvable:$true] %s15
      %21 = dma.hbm_to_vmem [thread:$0]  %s0, 2560, %s16, [#allocation3], 128, 128, 8
    $region5: #{_sat_agg_loss_impl.1} parent=1 // pred_fallthru
      _
    // Predicated region
    $region6: #{_sat_agg_loss_impl.1} parent=1 // pred_check
      _
    $region7: #{_sat_agg_loss_impl.1} parent=1 // pred_check_branch
      %23 = sbr.rel (0) target = $region9
    $region8: #{_sat_agg_loss_impl.1} parent=1 // pred_region
      _
    $region9: #{_sat_agg_loss_impl.1} parent=1 // pred_fallthru
      _
    // Predicated region
    $region10: #{_sat_agg_loss_impl.1} parent=1 // pred_check
      _
    $region11: #{_sat_agg_loss_impl.1} parent=1 // pred_check_branch
      %25 = sbr.rel (0) target = $region13
    $region12: #{_sat_agg_loss_impl.1} parent=1 // pred_region
      _
    $region13: #{_sat_agg_loss_impl.1} parent=1 // pred_fallthru
      _
    // Predicated region
    $region14: #{_sat_agg_loss_impl.1} parent=1 // pred_check
      _
    $region15: #{_sat_agg_loss_impl.1} parent=1 // pred_check_branch
      %27 = sbr.rel (0) target = $region17
    $region16: #{_sat_agg_loss_impl.1} parent=1 // pred_region
      _
    $region17: #{_sat_agg_loss_impl.1} parent=1 // pred_fallthru
      _
    // Predicated region
    $region18: #{_sat_agg_loss_impl.1} parent=1 // pred_check
      _
    $region19: #{_sat_agg_loss_impl.1} parent=1 // pred_check_branch
      %29 = sbr.rel (0) target = $region21
    $region20: #{_sat_agg_loss_impl.1} parent=1 // pred_region
      %30 = dma.done [#allocation3], 2560
    $region21: #{_sat_agg_loss_impl.1} parent=1 // pred_fallthru
      _
    %v31 = vld [vmem:[%s2] sm:$0xff]
    %v32 = vld [vmem:[%s2 + $0x8] sm:$0x3]
    %v33 = vmul.f32 %v31, 0.9999
    %v34 = vmul.f32 %v32, 0.9999
    %v35 = vadd.f32 %v33, 0.0001
    %v36 = vadd.f32 %v34, 0.0001
    %v37 = vmul.f32 %v35, 0.9998
    %v38 = vmul.f32 %v36, 0.9998
    %v39 = vmul.f32 %v35, 9.999e-05
    %v40 = vmul.f32 %v36, 9.999e-05
    %v41 = vadd.f32 %v39, 0.0001
    %v42 = vadd.f32 %v40, 0.0001
    %v43 = vld [vmem:[%s3] sm:$0x1]
    %v44 = vld [vmem:[%s1] sm:$0x1]
    %v45 = vlaneseq
    %v46 = vshrl.u32 %v45, 7
    %v47 = vsub.s32 0, %v46
    %v48 = vrot.slane %v44, %v47
    %v49 = vmul.f32 %v48, %v37
    %v50 = vmul.f32 %v48, %v38
    %v51 = vadd.f32 %v49, %v41
    %v52 = vadd.f32 %v50, %v42
    %v53 = vmul.f32 %v51, %v51
    %v54 = vmul.f32 %v52, %v52
    %v55 = vld [vmem:[#allocation2] sm:$0xff]
    %v56 = vld [vmem:[#allocation2 + $0x8] sm:$0x3]
    %57 = vset.pattern.permute.xlu0 0
    %58 = vperm.xlu0 %57, %v55
    %v59 = vpop.permute.xlu0 %58
    %60 = vset.pattern.permute.xlu0 0
    %61 = vperm.xlu0 %60, %v56
    %v62 = vpop.permute.xlu0 %61
    %v63 = vlaneseq
    %v64 = vshrl.u32 %v63, 7
    %v65 = vsub.s32 0, %v64
    %v66 = vrot.slane %v43, %v65
    %vm67 = vcmp.eq.s32.totalorder %v59, %v66
    %vm68 = vcmp.eq.s32.totalorder %v62, %v66
    %v69 = vsel %vm67, %v53, 0.0
    %v70 = vsel %vm68, %v54, 0.0
    %v71 = vadd.f32 %v69, 0.0
    %v72 = vadd.f32 %v70, 0.0
    %v73 = vsel %vm67, 1.0, 0.0
    %v74 = vsel %vm68, 1.0, 0.0
    %v75 = vadd.f32 %v73, 0.0
    %v76 = vadd.f32 %v74, 0.0
    %v77 = vld [vmem:[%s1 + $0x1] sm:$0x1]
    %v78 = vlaneseq
    %v79 = vshrl.u32 %v78, 7
    %v80 = vsub.s32 0, %v79
    %v81 = vrot.slane %v77, %v80
    %v82 = vmul.f32 %v81, %v37
    %v83 = vmul.f32 %v81, %v38
    %v84 = vadd.f32 %v82, %v41
    %v85 = vadd.f32 %v83, %v42
    %v86 = vmul.f32 %v84, %v84
    %v87 = vmul.f32 %v85, %v85
    %s88 = scalar_lea.vmem [#allocation2], 16
    %v89 = vld [vmem:[%s88] sm:$0xff]
    %v90 = vld [vmem:[%s88 + $0x8] sm:$0x3]
    %91 = vset.pattern.permute.xlu0 0
    %92 = vperm.xlu0 %91, %v89
    %v93 = vpop.permute.xlu0 %92
    %94 = vset.pattern.permute.xlu0 0
    %95 = vperm.xlu0 %94, %v90
    %v96 = vpop.permute.xlu0 %95
    %vm97 = vcmp.eq.s32.totalorder %v93, %v66
    %vm98 = vcmp.eq.s32.totalorder %v96, %v66
    %v99 = vsel %vm97, %v86, 0.0
    %v100 = vsel %vm98, %v87, 0.0
    %v101 = vadd.f32 %v71, %v99
    %v102 = vadd.f32 %v72, %v100
    %v103 = vsel %vm97, 1.0, 0.0
    %v104 = vsel %vm98, 1.0, 0.0
    %v105 = vadd.f32 %v75, %v103
    %v106 = vadd.f32 %v76, %v104
    %v107 = vld [vmem:[%s1 + $0x2] sm:$0x1]
    %v108 = vlaneseq
    %v109 = vshrl.u32 %v108, 7
    %v110 = vsub.s32 0, %v109
    %v111 = vrot.slane %v107, %v110
    %v112 = vmul.f32 %v111, %v37
    %v113 = vmul.f32 %v111, %v38
    %v114 = vadd.f32 %v112, %v41
    %v115 = vadd.f32 %v113, %v42
    %v116 = vmul.f32 %v114, %v114
    %v117 = vmul.f32 %v115, %v115
    %s118 = scalar_lea.vmem [#allocation2], 32
    %v119 = vld [vmem:[%s118] sm:$0xff]
    %v120 = vld [vmem:[%s118 + $0x8] sm:$0x3]
    %121 = vset.pattern.permute.xlu0 0
    %122 = vperm.xlu0 %121, %v119
    %v123 = vpop.permute.xlu0 %122
    %124 = vset.pattern.permute.xlu0 0
    %125 = vperm.xlu0 %124, %v120
    %v126 = vpop.permute.xlu0 %125
    %vm127 = vcmp.eq.s32.totalorder %v123, %v66
    %vm128 = vcmp.eq.s32.totalorder %v126, %v66
    %v129 = vsel %vm127, %v116, 0.0
    %v130 = vsel %vm128, %v117, 0.0
    %v131 = vadd.f32 %v101, %v129
    %v132 = vadd.f32 %v102, %v130
    %v133 = vsel %vm127, 1.0, 0.0
    %v134 = vsel %vm128, 1.0, 0.0
    %v135 = vadd.f32 %v105, %v133
    %v136 = vadd.f32 %v106, %v134
    %v137 = vld [vmem:[%s1 + $0x3] sm:$0x1]
    %v138 = vlaneseq
    %v139 = vshrl.u32 %v138, 7
    %v140 = vsub.s32 0, %v139
    %v141 = vrot.slane %v137, %v140
    %v142 = vmul.f32 %v141, %v37
    %v143 = vmul.f32 %v141, %v38
    %v144 = vadd.f32 %v142, %v41
    %v145 = vadd.f32 %v143, %v42
    %v146 = vmul.f32 %v144, %v144
    %v147 = vmul.f32 %v145, %v145
    %s148 = scalar_lea.vmem [#allocation2], 48
    %v149 = vld [vmem:[%s148] sm:$0xff]
    %v150 = vld [vmem:[%s148 + $0x8] sm:$0x3]
    %151 = vset.pattern.permute.xlu0 0
    %152 = vperm.xlu0 %151, %v149
    %v153 = vpop.permute.xlu0 %152
    %154 = vset.pattern.permute.xlu0 0
    %155 = vperm.xlu0 %154, %v150
    %v156 = vpop.permute.xlu0 %155
    %vm157 = vcmp.eq.s32.totalorder %v153, %v66
    %vm158 = vcmp.eq.s32.totalorder %v156, %v66
    %v159 = vsel %vm157, %v146, 0.0
    %v160 = vsel %vm158, %v147, 0.0
    %v161 = vadd.f32 %v131, %v159
    %v162 = vadd.f32 %v132, %v160
    %v163 = vsel %vm157, 1.0, 0.0
    %v164 = vsel %vm158, 1.0, 0.0
    %v165 = vadd.f32 %v135, %v163
    %v166 = vadd.f32 %v136, %v164
    %v167 = vld [vmem:[%s1 + $0x4] sm:$0x1]
    %v168 = vlaneseq
    %v169 = vshrl.u32 %v168, 7
    %v170 = vsub.s32 0, %v169
    %v171 = vrot.slane %v167, %v170
    %v172 = vmul.f32 %v171, %v37
    %v173 = vmul.f32 %v171, %v38
    %v174 = vadd.f32 %v172, %v41
    %v175 = vadd.f32 %v173, %v42
    %v176 = vmul.f32 %v174, %v174
    %v177 = vmul.f32 %v175, %v175
    %s178 = scalar_lea.vmem [#allocation2], 64
    %v179 = vld [vmem:[%s178] sm:$0xff]
    %v180 = vld [vmem:[%s178 + $0x8] sm:$0x3]
    %181 = vset.pattern.permute.xlu0 0
    %182 = vperm.xlu0 %181, %v179
    %v183 = vpop.permute.xlu0 %182
    %184 = vset.pattern.permute.xlu0 0
    %185 = vperm.xlu0 %184, %v180
    %v186 = vpop.permute.xlu0 %185
    %vm187 = vcmp.eq.s32.totalorder %v183, %v66
    %vm188 = vcmp.eq.s32.totalorder %v186, %v66
    %v189 = vsel %vm187, %v176, 0.0
    %v190 = vsel %vm188, %v177, 0.0
    %v191 = vadd.f32 %v161, %v189
    %v192 = vadd.f32 %v162, %v190
    %v193 = vsel %vm187, 1.0, 0.0
    %v194 = vsel %vm188, 1.0, 0.0
    %v195 = vadd.f32 %v165, %v193
    %v196 = vadd.f32 %v166, %v194
    %v197 = vld [vmem:[%s1 + $0x5] sm:$0x1]
    %v198 = vlaneseq
    %v199 = vshrl.u32 %v198, 7
    %v200 = vsub.s32 0, %v199
    %v201 = vrot.slane %v197, %v200
    %v202 = vmul.f32 %v201, %v37
    %v203 = vmul.f32 %v201, %v38
    %v204 = vadd.f32 %v202, %v41
    %v205 = vadd.f32 %v203, %v42
    %v206 = vmul.f32 %v204, %v204
    %v207 = vmul.f32 %v205, %v205
    %s208 = scalar_lea.vmem [#allocation2], 80
    %v209 = vld [vmem:[%s208] sm:$0xff]
    %v210 = vld [vmem:[%s208 + $0x8] sm:$0x3]
    %211 = vset.pattern.permute.xlu0 0
    %212 = vperm.xlu0 %211, %v209
    %v213 = vpop.permute.xlu0 %212
    %214 = vset.pattern.permute.xlu0 0
    %215 = vperm.xlu0 %214, %v210
    %v216 = vpop.permute.xlu0 %215
    %vm217 = vcmp.eq.s32.totalorder %v213, %v66
    %vm218 = vcmp.eq.s32.totalorder %v216, %v66
    %v219 = vsel %vm217, %v206, 0.0
    %v220 = vsel %vm218, %v207, 0.0
    %v221 = vadd.f32 %v191, %v219
    %v222 = vadd.f32 %v192, %v220
    %v223 = vsel %vm217, 1.0, 0.0
    %v224 = vsel %vm218, 1.0, 0.0
    %v225 = vadd.f32 %v195, %v223
    %v226 = vadd.f32 %v196, %v224
    %v227 = vld [vmem:[%s1 + $0x6] sm:$0x1]
    %v228 = vlaneseq
    %v229 = vshrl.u32 %v228, 7
    %v230 = vsub.s32 0, %v229
    %v231 = vrot.slane %v227, %v230
    %v232 = vmul.f32 %v231, %v37
    %v233 = vmul.f32 %v231, %v38
    %v234 = vadd.f32 %v232, %v41
    %v235 = vadd.f32 %v233, %v42
    %v236 = vmul.f32 %v234, %v234
    %v237 = vmul.f32 %v235, %v235
    %s238 = scalar_lea.vmem [#allocation2], 96
    %v239 = vld [vmem:[%s238] sm:$0xff]
    %v240 = vld [vmem:[%s238 + $0x8] sm:$0x3]
    %241 = vset.pattern.permute.xlu0 0
    %242 = vperm.xlu0 %241, %v239
    %v243 = vpop.permute.xlu0 %242
    %244 = vset.pattern.permute.xlu0 0
    %245 = vperm.xlu0 %244, %v240
    %v246 = vpop.permute.xlu0 %245
    %vm247 = vcmp.eq.s32.totalorder %v243, %v66
    %vm248 = vcmp.eq.s32.totalorder %v246, %v66
    %v249 = vsel %vm247, %v236, 0.0
    %v250 = vsel %vm248, %v237, 0.0
    %v251 = vadd.f32 %v221, %v249
    %v252 = vadd.f32 %v222, %v250
    %v253 = vsel %vm247, 1.0, 0.0
    %v254 = vsel %vm248, 1.0, 0.0
    %v255 = vadd.f32 %v225, %v253
    %v256 = vadd.f32 %v226, %v254
    %v257 = vld [vmem:[%s1 + $0x7] sm:$0x1]
    %v258 = vlaneseq
    %v259 = vshrl.u32 %v258, 7
    %v260 = vsub.s32 0, %v259
    %v261 = vrot.slane %v257, %v260
    %v262 = vmul.f32 %v261, %v37
    %v263 = vmul.f32 %v261, %v38
    %v264 = vadd.f32 %v262, %v41
    %v265 = vadd.f32 %v263, %v42
    %v266 = vmul.f32 %v264, %v264
    %v267 = vmul.f32 %v265, %v265
    %s268 = scalar_lea.vmem [#allocation2], 112
    %v269 = vld [vmem:[%s268] sm:$0xff]
    %v270 = vld [vmem:[%s268 + $0x8] sm:$0x3]
    %271 = vset.pattern.permute.xlu0 0
    %272 = vperm.xlu0 %271, %v269
    %v273 = vpop.permute.xlu0 %272
    %274 = vset.pattern.permute.xlu0 0
    %275 = vperm.xlu0 %274, %v270
    %v276 = vpop.permute.xlu0 %275
    %vm277 = vcmp.eq.s32.totalorder %v273, %v66
    %vm278 = vcmp.eq.s32.totalorder %v276, %v66
    %v279 = vsel %vm277, %v266, 0.0
    %v280 = vsel %vm278, %v267, 0.0
    %v281 = vadd.f32 %v251, %v279
    %v282 = vadd.f32 %v252, %v280
    %v283 = vsel %vm277, 1.0, 0.0
    %v284 = vsel %vm278, 1.0, 0.0
    %v285 = vadd.f32 %v255, %v283
    %v286 = vadd.f32 %v256, %v284
    %v287 = vld [vmem:[%s1 + $0x8] sm:$0x1]
    %v288 = vlaneseq
    %v289 = vshrl.u32 %v288, 7
    %v290 = vsub.s32 0, %v289
    %v291 = vrot.slane %v287, %v290
    %v292 = vmul.f32 %v291, %v37
    %v293 = vmul.f32 %v291, %v38
    %v294 = vadd.f32 %v292, %v41
    %v295 = vadd.f32 %v293, %v42
    %v296 = vmul.f32 %v294, %v294
    %v297 = vmul.f32 %v295, %v295
    %s298 = scalar_lea.vmem [#allocation2], 128
    %v299 = vld [vmem:[%s298] sm:$0xff]
    %v300 = vld [vmem:[%s298 + $0x8] sm:$0x3]
    %301 = vset.pattern.permute.xlu0 0
    %302 = vperm.xlu0 %301, %v299
    %v303 = vpop.permute.xlu0 %302
    %304 = vset.pattern.permute.xlu0 0
    %305 = vperm.xlu0 %304, %v300
    %v306 = vpop.permute.xlu0 %305
    %vm307 = vcmp.eq.s32.totalorder %v303, %v66
    %vm308 = vcmp.eq.s32.totalorder %v306, %v66
    %v309 = vsel %vm307, %v296, 0.0
    %v310 = vsel %vm308, %v297, 0.0
    %v311 = vadd.f32 %v281, %v309
    %v312 = vadd.f32 %v282, %v310
    %v313 = vsel %vm307, 1.0, 0.0
    %v314 = vsel %vm308, 1.0, 0.0
    %v315 = vadd.f32 %v285, %v313
    %v316 = vadd.f32 %v286, %v314
    %v317 = vld [vmem:[%s1 + $0x9] sm:$0x1]
    %v318 = vlaneseq
    %v319 = vshrl.u32 %v318, 7
    %v320 = vsub.s32 0, %v319
    %v321 = vrot.slane %v317, %v320
    %v322 = vmul.f32 %v321, %v37
    %v323 = vmul.f32 %v321, %v38
    %v324 = vadd.f32 %v322, %v41
    %v325 = vadd.f32 %v323, %v42
    %v326 = vmul.f32 %v324, %v324
    %v327 = vmul.f32 %v325, %v325
    %s328 = scalar_lea.vmem [#allocation2], 144
    %v329 = vld [vmem:[%s328] sm:$0xff]
    %v330 = vld [vmem:[%s328 + $0x8] sm:$0x3]
    %331 = vset.pattern.permute.xlu0 0
    %332 = vperm.xlu0 %331, %v329
    %v333 = vpop.permute.xlu0 %332
    %334 = vset.pattern.permute.xlu0 0
    %335 = vperm.xlu0 %334, %v330
    %v336 = vpop.permute.xlu0 %335
    %vm337 = vcmp.eq.s32.totalorder %v333, %v66
    %vm338 = vcmp.eq.s32.totalorder %v336, %v66
    %v339 = vsel %vm337, %v326, 0.0
    %v340 = vsel %vm338, %v327, 0.0
    %v341 = vadd.f32 %v311, %v339
    %v342 = vadd.f32 %v312, %v340
    %v343 = vsel %vm337, 1.0, 0.0
    %v344 = vsel %vm338, 1.0, 0.0
    %v345 = vadd.f32 %v315, %v343
    %v346 = vadd.f32 %v316, %v344
    %vm347 = vcmask 1041408
    %v348 = vsel %vm347, %v342, 0.0
    %v349 = vadd.f32 %v341, %v348
    %v350 = vrot.slane %v349, 4
    %v351 = vadd.f32 %v349, %v350
    %v352 = vrot.slane %v351, 2
    %v353 = vadd.f32 %v351, %v352
    %v354 = vrot.slane %v353, 1
    %v355 = vadd.f32 %v353, %v354
    %v356 = vsel %vm347, %v346, 0.0
    %v357 = vadd.f32 %v345, %v356
    %v358 = vrot.slane %v357, 4
    %v359 = vadd.f32 %v357, %v358
    %v360 = vrot.slane %v359, 2
    %v361 = vadd.f32 %v359, %v360
    %v362 = vrot.slane %v361, 1
    %v363 = vadd.f32 %v361, %v362
    %vm364 = vcmp.gt.f32.partialorder %v363, 0.0
    %v365 = vmax.f32 %v363, 1.0
    %v366 = vrcp.pop %v365
    %v367 = vmul.f32 %v355, %v366
    %v368 = vsel %vm364, %v367, 1.0
    %v369 = vrsqrt.pop %v368
    %v370 = vmul.f32 %v368, %v369
    %vm371 = vcmp.eq.f32.partialorder %v368, inf
    %v372 = vsel %vm371, %v368, %v370
    %vm373 = vcmp.eq.f32.partialorder %v368, 0.0
    %v374 = vand.u32 %v368, 2147483648
    %v375 = vsel %vm373, %v374, %v372
    %v376 = vsel %vm364, %v375, 0.0
    %v377 = vmul.f32 %v376, 0.9999
    %v378 = vsub.f32 1.0, %v377
    %v379 = vmul.f32 %v378, %v378
    %v380 = vlaneseq
    %v381 = vand.u32 %v380, 127
    %s382 = smul.u32 0, 128
    %v383 = vstv %s382
    %v384 = vadd.s32 %v381, %v383
    %vm385 = vcmp.lt.s32.totalorder %v384, 8
    %v386 = vsel %vm385, %v379, 0.0
    %387 = vst [vmem:[%s4] sm:$0x1] %v386
    // Predicated region
    $region22: #{_sat_agg_loss_impl.1} parent=1 // pred_check
      _
    $region23: #{_sat_agg_loss_impl.1} parent=1 // pred_check_branch
      %389 = sbr.rel (0) target = $region25
    $region24: #{_sat_agg_loss_impl.1} parent=1 // pred_region
      _
    $region25: #{_sat_agg_loss_impl.1} parent=1 // pred_fallthru
      _
    // Predicated region
    $region26: #{_sat_agg_loss_impl.1} parent=1 // pred_check
      _
    $region27: #{_sat_agg_loss_impl.1} parent=1 // pred_check_branch
      %391 = sbr.rel (0) target = $region29
    $region28: #{_sat_agg_loss_impl.1} parent=1 // pred_region
      _
    $region29: #{_sat_agg_loss_impl.1} parent=1 // pred_fallthru
      _
    %392 = vsyncpa [#allocation3], 1

</llo_original>
